<compile_context>
chip_gen: v5e
topology: v5e:2x2
jax: 0.10.0
libtpu: 0.0.40
codegen_flags: <defaults>
</compile_context>

<pallas_src>
import jax
import jax.numpy as jnp
from jax.experimental import pallas as pl
from jax.experimental.pallas import tpu as pltpu


def proxynet_kernel(x_ref, w1_ref, shift_ref, w2_ref, b2_ref, o_ref):
    # x_ref:     (bn, Cin, t_hw)  activation tile (bf16 preferred, f32 accepted)
    # w1_ref:    (Cin, Cin)       bf16, conv1 weight with BN scale folded into rows
    # shift_ref: (Cin, 1)         f32, BN shift (beta - mean*scale)
    # w2_ref:    (NCp, Cin)       bf16, fc weight zero-padded to NCp rows
    # b2_ref:    (NCp, 1)         f32, fc bias zero-padded
    # o_ref:     (bn, NCp, t_hw)  f32 output tile
    w1 = w1_ref[...]
    w2 = w2_ref[...]
    shift = shift_ref[...]
    bias = b2_ref[...]
    for b in range(x_ref.shape[0]):            # bn is small & static -> unrolled
        xb = x_ref[b].astype(jnp.bfloat16)     # no-op when x is already bf16
        h = jnp.dot(w1, xb, preferred_element_type=jnp.float32)     # (Cin, t_hw)
        h = jnp.maximum(h + shift, 0.0)        # folded BN shift + ReLU (f32)
        out = jnp.dot(w2, h.astype(jnp.bfloat16),
                      preferred_element_type=jnp.float32)           # (NCp, t_hw)
        o_ref[b] = (out + bias).astype(o_ref.dtype)


# Conservative working-set target so large spatial tiles stay portable to
# v7x (64 MiB physical VMEM) and to v5e with its 16 MiB default scoped limit.
_VMEM_BUDGET = 24 * 1024 * 1024
_VMEM_LIMIT = 32 * 1024 * 1024
_LANE_TARGET = 2048          # lanes per grid step; >=512 needed for ~85% HBM roofline


def _largest_divisor_leq(n, cap):
    """Largest divisor of n that is <= cap (n >= 1, cap >= 1)."""
    best = 1
    d = 1
    while d * d <= n:
        if n % d == 0:
            if d <= cap:
                best = max(best, d)
            q = n // d
            if q <= cap:
                best = max(best, q)
        d += 1
    return best


def _choose_tiling(N, HWp, Cin, NCp, x_itemsize):
    """Pick (bn, t_hw): batch rows per block and spatial (lane) tile width."""
    lane_units = HWp // 128
    per_lane_bytes = Cin * x_itemsize + NCp * 4            # x tile + out tile per lane
    max_lanes = max(128, (_VMEM_BUDGET // (3 * per_lane_bytes)) // 128 * 128)

    # Largest lane-dense tile that divides the padded spatial extent and fits VMEM.
    t_hw = 128 * _largest_divisor_leq(lane_units, max(1, max_lanes // 128))

    # v7x has 2 TensorCores: prefer >= 2 "parallel" grid steps when possible.
    if N * (HWp // t_hw) < 2 and lane_units >= 2:
        t_hw = 128 * _largest_divisor_leq(lane_units, max(1, lane_units // 2))

    # Small feature maps: fold batch rows into the block so each grid step moves
    # enough lanes to amortize per-step overhead, while keeping >= 2 grid steps.
    bn = 1
    hw_steps = HWp // t_hw
    while (bn * 2 <= N and N % (bn * 2) == 0
           and bn * t_hw < _LANE_TARGET
           and (N // (bn * 2)) * hw_steps >= 2
           and (bn * 2) * t_hw * per_lane_bytes * 3 <= _VMEM_BUDGET):
        bn *= 2
    return bn, t_hw


@jax.jit
def proxynet_forward(x_nchw, w1, bn_gamma, bn_beta, bn_mean, bn_var, w2, b2,
                     eps=1e-5):
    """ProxyNet_resoFixed forward (up_sample=None path).

    x_nchw: (N, Cin, H, W), bf16 (preferred: halves the dominant HBM read) or f32.
    Returns (N, num_classes, H, W) float32.
    """
    N, Cin, H, W = x_nchw.shape
    NC = w2.shape[0]
    HW = H * W

    # Free reshape; NCHW channel-major layout preserved (no transpose).
    x = x_nchw.reshape(N, Cin, HW)

    # Lane-dense spatial axis: zero-pad H*W up to a multiple of 128 so output
    # stores are unmasked dense vst (only done when actually needed).
    HWp = ((HW + 127) // 128) * 128
    if HWp != HW:
        x = jnp.pad(x, ((0, 0), (0, 0), (0, HWp - HW)))

    # Fold eval-mode BatchNorm: scale into conv1 rows; shift stays as an add.
    bn_scale = bn_gamma / jnp.sqrt(bn_var + eps)
    bn_shift = bn_beta - bn_mean * bn_scale
    w1m = (w1.reshape(Cin, Cin) * bn_scale[:, None]).astype(jnp.bfloat16)
    shift = bn_shift.reshape(Cin, 1).astype(jnp.float32)

    # Pad num_classes to a sublane multiple only (not 128: the kernel is
    # HBM-bound, MXU slack is free, and more padding = more output traffic).
    NCp = ((NC + 7) // 8) * 8
    w2m = jnp.pad(w2.reshape(NC, Cin), ((0, NCp - NC), (0, 0))).astype(jnp.bfloat16)
    b2m = jnp.pad(b2.reshape(NC, 1), ((0, NCp - NC), (0, 0))).astype(jnp.float32)

    bn_blk, t_hw = _choose_tiling(N, HWp, Cin, NCp, x.dtype.itemsize)
    grid = (N // bn_blk, HWp // t_hw)

    cost = pl.CostEstimate(
        flops=2 * N * HWp * Cin * (Cin + NCp),
        transcendentals=0,
        bytes_accessed=(N * Cin * HWp * x.dtype.itemsize   # x read
                        + N * NCp * HWp * 4                # out write
                        + Cin * Cin * 2 + NCp * Cin * 2    # weights (bf16)
                        + Cin * 4 + NCp * 4),              # shift + bias
    )

    # Deeper input buffering only pays off on long memory-bound grids.
    x_spec_kwargs = {}
    if grid[1] >= 8:
        x_spec_kwargs["pipeline_mode"] = pl.Buffered(3)

    out_p = pl.pallas_call(
        proxynet_kernel,
        out_shape=jax.ShapeDtypeStruct((N, NCp, HWp), jnp.float32),
        grid_spec=pltpu.PrefetchScalarGridSpec(
            num_scalar_prefetch=0,
            grid=grid,
            in_specs=[
                pl.BlockSpec((bn_blk, Cin, t_hw), lambda n, j: (n, 0, j),
                             **x_spec_kwargs),                               # x tile
                pl.BlockSpec((Cin, Cin), lambda n, j: (0, 0)),               # w1 (resident)
                pl.BlockSpec((Cin, 1), lambda n, j: (0, 0)),                 # BN shift
                pl.BlockSpec((NCp, Cin), lambda n, j: (0, 0)),               # w2 (resident)
                pl.BlockSpec((NCp, 1), lambda n, j: (0, 0)),                 # fc bias
            ],
            out_specs=pl.BlockSpec((bn_blk, NCp, t_hw), lambda n, j: (n, 0, j)),
        ),
        compiler_params=pltpu.CompilerParams(
            dimension_semantics=("parallel", "parallel"),
            vmem_limit_bytes=_VMEM_LIMIT,
        ),
        cost_estimate=cost,
    )(x, w1m, shift, w2m, b2m)

    # Drop class/spatial padding; reshape back to NCHW (output is small).
    return out_p[:, :NC, :HW].reshape(N, NC, H, W)


def _kaiming_normal_fan_out(key, shape):
    # PyTorch kaiming_normal_(mode='fan_out', nonlinearity='relu') for a conv
    # weight (Cout, Cin, kh, kw): std = sqrt(2 / (Cout * kh * kw)).
    cout, _, kh, kw = shape
    std = (2.0 / (cout * kh * kw)) ** 0.5
    return jax.random.normal(key, shape, dtype=jnp.float32) * std


def make_params(key, in_channels, num_classes):
    k1, k2 = jax.random.split(key, 2)
    w1 = _kaiming_normal_fan_out(k1, (in_channels, in_channels, 1, 1))
    # BatchNorm2d init: weight=1, bias=0; default running stats (mean=0, var=1).
    bn_gamma = jnp.ones((in_channels,), jnp.float32)
    bn_beta = jnp.zeros((in_channels,), jnp.float32)
    bn_mean = jnp.zeros((in_channels,), jnp.float32)
    bn_var = jnp.ones((in_channels,), jnp.float32)
    w2 = _kaiming_normal_fan_out(k2, (num_classes, in_channels, 1, 1))
    b2 = jnp.zeros((num_classes,), jnp.float32)   # nn.init.constant_(bias, 0)
    return w1, bn_gamma, bn_beta, bn_mean, bn_var, w2, b2


def _reference(x, w1, bn_gamma, bn_beta, bn_mean, bn_var, w2, b2, eps=1e-5):
    # Pure-JAX f32 reference (eval-mode BN), NCHW throughout.
    N, Cin, H, W = x.shape
    NC = w2.shape[0]
    h = jnp.einsum('oc,nchw->nohw', w1.reshape(Cin, Cin), x)
    scale = bn_gamma / jnp.sqrt(bn_var + eps)
    shift = bn_beta - bn_mean * scale
    h = h * scale[None, :, None, None] + shift[None, :, None, None]
    h = jnp.maximum(h, 0.0)
    o = jnp.einsum('oc,nchw->nohw', w2.reshape(NC, Cin), h)
    return o + b2[None, :, None, None]


if __name__ == "__main__":
    key = jax.random.PRNGKey(0)
    kx1, kx2, kp1, kp2 = jax.random.split(key, 4)

    # Case 1: module defaults (num_classes=28, in_channels=256), 16x16 maps,
    # bf16 activations (halves the dominant HBM read stream).
    N, Cin, H, W, NC = 2, 256, 16, 16, 28
    x1 = jax.random.normal(kx1, (N, Cin, H, W), dtype=jnp.float32).astype(jnp.bfloat16)
    p1 = make_params(kp1, Cin, NC)
    out1 = jax.block_until_ready(proxynet_forward(x1, *p1))
    ref1 = _reference(x1.astype(jnp.float32), *p1)
    assert out1.shape == (N, NC, H, W)
    err1 = float(jnp.max(jnp.abs(out1 - ref1)))
    tol1 = 2e-2 * (float(jnp.max(jnp.abs(ref1))) + 1e-6)
    assert err1 <= tol1, f"case1 mismatch: max_err={err1}, tol={tol1}"

    # Case 2: 14x14 feature map (H*W=196, not a multiple of 128) in f32 ->
    # exercises the zero-padded lane-dense spatial path and the f32 input path.
    N2, C2, H2, W2, NC2 = 2, 64, 14, 14, 10
    x2 = jax.random.normal(kx2, (N2, C2, H2, W2), dtype=jnp.float32)
    p2 = make_params(kp2, C2, NC2)
    out2 = jax.block_until_ready(proxynet_forward(x2, *p2))
    ref2 = _reference(x2, *p2)
    assert out2.shape == (N2, NC2, H2, W2)
    err2 = float(jnp.max(jnp.abs(out2 - ref2)))
    tol2 = 2e-2 * (float(jnp.max(jnp.abs(ref2))) + 1e-6)
    assert err2 <= tol2, f"case2 mismatch: max_err={err2}, tol={tol2}"

    print("KERNEL_OK")
</pallas_src>

<mosaic_0001>
module attributes {stable_mosaic.version = 11 : i64} {
  func.func @proxynet_kernel(%arg0: i32, %arg1: i32, %arg2: memref<1x256x256xbf16, #tpu.memory_space<vmem>>, %arg3: memref<256x256xbf16, #tpu.memory_space<vmem>>, %arg4: memref<256x1xf32, #tpu.memory_space<vmem>>, %arg5: memref<32x256xbf16, #tpu.memory_space<vmem>>, %arg6: memref<32x1xf32, #tpu.memory_space<vmem>>, %arg7: memref<1x32x256xf32, #tpu.memory_space<vmem>>) attributes {dimension_semantics = [#tpu.dimension_semantics<parallel>, #tpu.dimension_semantics<parallel>], iteration_bounds = array<i64: 2, 1>, scalar_prefetch = 0 : i64, scratch_operands = 0 : i64, tpu.core_type = #tpu.core_type<tc>, window_params = [{transform_indices = @transform_0, window_bounds = array<i64: 1, 256, 256>}, {pipeline_mode = #tpu.pipeline_mode<synchronous>, transform_indices = @transform_1, window_bounds = array<i64: 256, 256>}, {pipeline_mode = #tpu.pipeline_mode<synchronous>, transform_indices = @transform_2, window_bounds = array<i64: 256, 1>}, {pipeline_mode = #tpu.pipeline_mode<synchronous>, transform_indices = @transform_3, window_bounds = array<i64: 32, 256>}, {pipeline_mode = #tpu.pipeline_mode<synchronous>, transform_indices = @transform_4, window_bounds = array<i64: 32, 1>}, {transform_indices = @transform_5, window_bounds = array<i64: 1, 32, 256>}]} {
    %c0 = arith.constant 0 : index
    %c0_0 = arith.constant 0 : index
    %0 = vector.load %arg3[%c0, %c0_0] : memref<256x256xbf16, #tpu.memory_space<vmem>>, vector<256x256xbf16>
    %c0_1 = arith.constant 0 : index
    %c0_2 = arith.constant 0 : index
    %1 = vector.load %arg5[%c0_1, %c0_2] : memref<32x256xbf16, #tpu.memory_space<vmem>>, vector<32x256xbf16>
    %c0_3 = arith.constant 0 : index
    %c0_4 = arith.constant 0 : index
    %2 = vector.load %arg4[%c0_3, %c0_4] : memref<256x1xf32, #tpu.memory_space<vmem>>, vector<256x1xf32>
    %c0_5 = arith.constant 0 : index
    %c0_6 = arith.constant 0 : index
    %3 = vector.load %arg6[%c0_5, %c0_6] : memref<32x1xf32, #tpu.memory_space<vmem>>, vector<32x1xf32>
    %c0_7 = arith.constant 0 : index
    %c0_8 = arith.constant 0 : index
    %c0_9 = arith.constant 0 : index
    %4 = vector.load %arg2[%c0_7, %c0_8, %c0_9] : memref<1x256x256xbf16, #tpu.memory_space<vmem>>, vector<1x256x256xbf16>
    %5 = vector.shape_cast %4 : vector<1x256x256xbf16> to vector<256x256xbf16>
    %cst = arith.constant dense<0.000000e+00> : vector<256x256xf32>
    %6 = tpu.matmul %0, %5, %cst {dimension_numbers = #tpu.dot_dimension_numbers<[1], [0], [0], [1], [0, 0, 1, 1], [], []>} : vector<256x256xbf16>, vector<256x256xbf16>, vector<256x256xf32> -> vector<256x256xf32>
    %7 = vector.broadcast %2 : vector<256x1xf32> to vector<256x256xf32>
    %8 = arith.addf %6, %7 : vector<256x256xf32>
    %cst_10 = arith.constant 0.000000e+00 : f32
    %9 = vector.broadcast %cst_10 : f32 to vector<256x256xf32>
    %10 = arith.maximumf %8, %9 : vector<256x256xf32>
    %11 = arith.truncf %10 : vector<256x256xf32> to vector<256x256xbf16>
    %cst_11 = arith.constant dense<0.000000e+00> : vector<32x256xf32>
    %12 = tpu.matmul %1, %11, %cst_11 {dimension_numbers = #tpu.dot_dimension_numbers<[1], [0], [0], [1], [0, 0, 1, 1], [], []>} : vector<32x256xbf16>, vector<256x256xbf16>, vector<32x256xf32> -> vector<32x256xf32>
    %13 = vector.broadcast %3 : vector<32x1xf32> to vector<32x256xf32>
    %14 = arith.addf %12, %13 : vector<32x256xf32>
    %c0_12 = arith.constant 0 : index
    %c0_13 = arith.constant 0 : index
    %c0_14 = arith.constant 0 : index
    %15 = vector.load %arg7[%c0_12, %c0_13, %c0_14] : memref<1x32x256xf32, #tpu.memory_space<vmem>>, vector<1x32x256xf32>
    %16 = vector.shape_cast %15 : vector<1x32x256xf32> to vector<32x256xf32>
    %17 = vector.shape_cast %14 : vector<32x256xf32> to vector<1x32x256xf32>
    tpu.vector_store %arg7[%c0_12, %c0_13, %c0_14], %17 {strides = array<i32>} : memref<1x32x256xf32, #tpu.memory_space<vmem>>, vector<1x32x256xf32>,
    return
  }
  func.func @transform_0(%arg0: i32, %arg1: i32) -> (i32, i32, i32) {
    %c0_i32 = arith.constant 0 : i32
    %c0_i32_0 = arith.constant 0 : i32
    return %arg0, %c0_i32, %arg1 : i32, i32, i32
  }
  func.func @transform_1(%arg0: i32, %arg1: i32) -> (i32, i32) {
    %c0_i32 = arith.constant 0 : i32
    %c0_i32_0 = arith.constant 0 : i32
    %c0_i32_1 = arith.constant 0 : i32
    return %c0_i32, %c0_i32_0 : i32, i32
  }
  func.func @transform_2(%arg0: i32, %arg1: i32) -> (i32, i32) {
    %c0_i32 = arith.constant 0 : i32
    %c0_i32_0 = arith.constant 0 : i32
    %c0_i32_1 = arith.constant 0 : i32
    return %c0_i32, %c0_i32_0 : i32, i32
  }
  func.func @transform_3(%arg0: i32, %arg1: i32) -> (i32, i32) {
    %c0_i32 = arith.constant 0 : i32
    %c0_i32_0 = arith.constant 0 : i32
    %c0_i32_1 = arith.constant 0 : i32
    return %c0_i32, %c0_i32_0 : i32, i32
  }
  func.func @transform_4(%arg0: i32, %arg1: i32) -> (i32, i32) {
    %c0_i32 = arith.constant 0 : i32
    %c0_i32_0 = arith.constant 0 : i32
    %c0_i32_1 = arith.constant 0 : i32
    return %c0_i32, %c0_i32_0 : i32, i32
  }
  func.func @transform_5(%arg0: i32, %arg1: i32) -> (i32, i32, i32) {
    %c0_i32 = arith.constant 0 : i32
    %c0_i32_0 = arith.constant 0 : i32
    return %arg0, %c0_i32, %arg1 : i32, i32, i32
  }
}

</mosaic_0001>

<llo_original>
// kernel: proxynet_forward.1
$region0: #{proxynet_forward.1}
  #allocation0 [shape = 'u32[]', space=smem, size = 0x4, offset = 0x4, fixed_abs, tag = 'smem constant byte address 0x4 - core index']
  #allocation1 [shape = 'u32[72,128]{1,0:T(1,128)}', space=vmem, size = 0x9000, scoped, tag = 'internal scratch']
  %s0 = inlined_call_operand.vmem [shape: bf16[2,256,256], index: 0, kind: input, shape index: {}]
  %s1 = inlined_call_operand.vmem [shape: bf16[256,256], index: 1, kind: input, shape index: {}]
  %s2 = inlined_call_operand.vmem [shape: f32[256,1], index: 2, kind: input, shape index: {}]
  %s3 = inlined_call_operand.vmem [shape: bf16[32,256], index: 3, kind: input, shape index: {}]
  %s4 = inlined_call_operand.vmem [shape: f32[32,1], index: 4, kind: input, shape index: {}]
  %s5 = inlined_call_operand.vmem [shape: f32[2,32,256], index: 5, kind: output, shape index: {}]
  %s6 = sld [smem:[#allocation0]]
  $region53: #{proxynet_forward.1} parent=0
    _
  %s8 = ssub.s32 1, %s6
  %s9 = scalar_select 0, %s8, %s6
  loop: start=0, step=1, limit=4
  $region2: #{proxynet_forward.1} parent=0 // loop_pre_header
    _
  $region3: #{proxynet_forward.1} parent=0 // loop_header
    %s11 = sphi 0, %s15
    %p12 = scmp.ge.s32.totalorder %s11, 4
    %s18 = sphi 0, %s30
    %s19 = sphi 0, %s26
    %s20 = sphi 0, %s18
    %s21 = sphi 0, %s19
    %s22 = sphi 0, %s20
    %s23 = sphi 0, %s21
    %s35 = sphi 0, %s37
    %s38 = sphi 0, %s35
    %s39 = sphi 0, %s38
    %s55 = sphi 0, %s39
    %s59 = sphi 0, %s59
    %s61 = sphi 0, %s59
    %s62 = sphi 0, %s61
    %s76 = sphi 0, %s62
    %s80 = sphi 0, %s80
    %s82 = sphi 0, %s80
    %s83 = sphi 0, %s82
    %s97 = sphi 0, %s83
    %s101 = sphi 0, %s101
    %s103 = sphi 0, %s101
    %s104 = sphi 0, %s103
    %s118 = sphi 0, %s104
    %s122 = sphi 0, %s122
    %s124 = sphi 0, %s122
    %s125 = sphi 0, %s124
    %s139 = sphi 0, %s125
    %s147 = sphi 0, %s149
    %s150 = sphi 0, %s147
    %s151 = sphi 0, %s150
    %s167 = sphi 0, %s151
  $region4: #{proxynet_forward.1} parent=0 // loop_header_branch
    %14 = sbr.rel (%p12) target = $region8
  $region5: #{proxynet_forward.1} parent=0 // loop_body
    %s16 = ssub.s32 %s11, 1
    %s17 = ssub.s32 %s11, 2
    %s24 = sadd.s32 1, %s19
    %p25 = scmp.ge.s32.totalorder %s24, 1
    %s26 = scalar_select %p25, 0, %s24
    %s27 = sadd.s32 1, %s18
    %s28 = scalar_select %p25, %s27, %s18
    %p29 = scmp.ge.s32.totalorder %s28, 2
    %s30 = scalar_select %p29, 0, %s28
    %s31 = ssub.s32 %s18, %s30
    %s32 = ssub.s32 %s19, %s26
    %s33 = sor.u32 %s31, %s32
    %p34 = scmp.eq.s32.totalorder %s33, 0
    %s36 = sadd.s32 %s35, 1
    %s37 = scalar_select %p34, %s35, %s36
    %p40 = pneg %p34
    %p41 = scmp.eq.s32.totalorder %s11, 1
    %p42 = por %p40, %p41
    %p43 = scmp.ne.s32.totalorder %s35, %s38
    %p44 = scmp.eq.s32.totalorder %s11, 0
    %p45 = por %p43, %p44
    %p46 = scmp.ne.s32.totalorder %s35, %s38
    %p47 = scmp.eq.s32.totalorder %s16, 1
    %p48 = por %p46, %p47
    %p49 = scmp.ne.s32.totalorder %s38, %s39
    %p50 = scmp.eq.s32.totalorder %s16, 0
    %p51 = por %p49, %p50
    %p52 = scmp.ne.s32.totalorder %s38, %s39
    %p53 = scmp.eq.s32.totalorder %s17, 1
    %p54 = por %p52, %p53
    %p56 = scmp.ne.s32.totalorder %s39, %s55
    %p57 = scmp.eq.s32.totalorder %s17, 0
    %p58 = por %p56, %p57
    %s60 = sadd.s32 %s59, 1
    %p63 = scmp.eq.s32.totalorder %s11, 1
    %p64 = scmp.ne.s32.totalorder %s59, %s61
    %p65 = scmp.eq.s32.totalorder %s11, 0
    %p66 = por %p64, %p65
    %p67 = scmp.ne.s32.totalorder %s59, %s61
    %p68 = scmp.eq.s32.totalorder %s16, 1
    %p69 = por %p67, %p68
    %p70 = scmp.ne.s32.totalorder %s61, %s62
    %p71 = scmp.eq.s32.totalorder %s16, 0
    %p72 = por %p70, %p71
    %p73 = scmp.ne.s32.totalorder %s61, %s62
    %p74 = scmp.eq.s32.totalorder %s17, 1
    %p75 = por %p73, %p74
    %p77 = scmp.ne.s32.totalorder %s62, %s76
    %p78 = scmp.eq.s32.totalorder %s17, 0
    %p79 = por %p77, %p78
    %s81 = sadd.s32 %s80, 1
    %p84 = scmp.eq.s32.totalorder %s11, 1
    %p85 = scmp.ne.s32.totalorder %s80, %s82
    %p86 = scmp.eq.s32.totalorder %s11, 0
    %p87 = por %p85, %p86
    %p88 = scmp.ne.s32.totalorder %s80, %s82
    %p89 = scmp.eq.s32.totalorder %s16, 1
    %p90 = por %p88, %p89
    %p91 = scmp.ne.s32.totalorder %s82, %s83
    %p92 = scmp.eq.s32.totalorder %s16, 0
    %p93 = por %p91, %p92
    %p94 = scmp.ne.s32.totalorder %s82, %s83
    %p95 = scmp.eq.s32.totalorder %s17, 1
    %p96 = por %p94, %p95
    %p98 = scmp.ne.s32.totalorder %s83, %s97
    %p99 = scmp.eq.s32.totalorder %s17, 0
    %p100 = por %p98, %p99
    %s102 = sadd.s32 %s101, 1
    %p105 = scmp.eq.s32.totalorder %s11, 1
    %p106 = scmp.ne.s32.totalorder %s101, %s103
    %p107 = scmp.eq.s32.totalorder %s11, 0
    %p108 = por %p106, %p107
    %p109 = scmp.ne.s32.totalorder %s101, %s103
    %p110 = scmp.eq.s32.totalorder %s16, 1
    %p111 = por %p109, %p110
    %p112 = scmp.ne.s32.totalorder %s103, %s104
    %p113 = scmp.eq.s32.totalorder %s16, 0
    %p114 = por %p112, %p113
    %p115 = scmp.ne.s32.totalorder %s103, %s104
    %p116 = scmp.eq.s32.totalorder %s17, 1
    %p117 = por %p115, %p116
    %p119 = scmp.ne.s32.totalorder %s104, %s118
    %p120 = scmp.eq.s32.totalorder %s17, 0
    %p121 = por %p119, %p120
    %s123 = sadd.s32 %s122, 1
    %p126 = scmp.eq.s32.totalorder %s11, 1
    %p127 = scmp.ne.s32.totalorder %s122, %s124
    %p128 = scmp.eq.s32.totalorder %s11, 0
    %p129 = por %p127, %p128
    %p130 = scmp.ne.s32.totalorder %s122, %s124
    %p131 = scmp.eq.s32.totalorder %s16, 1
    %p132 = por %p130, %p131
    %p133 = scmp.ne.s32.totalorder %s124, %s125
    %p134 = scmp.eq.s32.totalorder %s16, 0
    %p135 = por %p133, %p134
    %p136 = scmp.ne.s32.totalorder %s124, %s125
    %p137 = scmp.eq.s32.totalorder %s17, 1
    %p138 = por %p136, %p137
    %p140 = scmp.ne.s32.totalorder %s125, %s139
    %p141 = scmp.eq.s32.totalorder %s17, 0
    %p142 = por %p140, %p141
    %s143 = ssub.s32 %s18, %s30
    %s144 = ssub.s32 %s19, %s26
    %s145 = sor.u32 %s143, %s144
    %p146 = scmp.eq.s32.totalorder %s145, 0
    %s148 = sadd.s32 %s147, 1
    %s149 = scalar_select %p146, %s147, %s148
    %p152 = pneg %p146
    %p153 = scmp.eq.s32.totalorder %s11, 1
    %p154 = por %p152, %p153
    %p155 = scmp.ne.s32.totalorder %s147, %s150
    %p156 = scmp.eq.s32.totalorder %s11, 0
    %p157 = por %p155, %p156
    %p158 = scmp.ne.s32.totalorder %s147, %s150
    %p159 = scmp.eq.s32.totalorder %s16, 1
    %p160 = por %p158, %p159
    %p161 = scmp.ne.s32.totalorder %s150, %s151
    %p162 = scmp.eq.s32.totalorder %s16, 0
    %p163 = por %p161, %p162
    %p164 = scmp.ne.s32.totalorder %s150, %s151
    %p165 = scmp.eq.s32.totalorder %s17, 1
    %p166 = por %p164, %p165
    %p168 = scmp.ne.s32.totalorder %s151, %s167
    %p169 = scmp.eq.s32.totalorder %s17, 0
    %p170 = por %p168, %p169
    %p171 = scmp.le.s32.totalorder 1, %s11
    %p172 = scmp.lt.s32.totalorder %s11, 3
    %p173 = pnand %p171, %p172
    %p174 = pneg %p173
    // Predicated region
    $region9: #{proxynet_forward.1} parent=5 // pred_check
      _
    $region10: #{proxynet_forward.1} parent=5 // pred_check_branch
      %176 = sbr.rel (%p173) target = $region12
    $region11: #{proxynet_forward.1} parent=5 // pred_region
      %s177 = ssub.s32 %s11, 1
      // Predicated region
      $region13: #{proxynet_forward.1} parent=11 // pred_check
        %p178 = pneg %p72
      $region14: #{proxynet_forward.1} parent=11 // pred_check_branch
        %180 = sbr.rel (%p178) target = $region16
      $region15: #{proxynet_forward.1} parent=11 // pred_region
        _
      $region16: #{proxynet_forward.1} parent=11 // pred_fallthru
        _
      // Predicated region
      $region17: #{proxynet_forward.1} parent=11 // pred_check
        %p181 = pneg %p93
      $region18: #{proxynet_forward.1} parent=11 // pred_check_branch
        %183 = sbr.rel (%p181) target = $region20
      $region19: #{proxynet_forward.1} parent=11 // pred_region
        _
      $region20: #{proxynet_forward.1} parent=11 // pred_fallthru
        _
      // Predicated region
      $region21: #{proxynet_forward.1} parent=11 // pred_check
        %p184 = pneg %p114
      $region22: #{proxynet_forward.1} parent=11 // pred_check_branch
        %186 = sbr.rel (%p184) target = $region24
      $region23: #{proxynet_forward.1} parent=11 // pred_region
        _
      $region24: #{proxynet_forward.1} parent=11 // pred_fallthru
        _
      // Predicated region
      $region25: #{proxynet_forward.1} parent=11 // pred_check
        %p187 = pneg %p135
      $region26: #{proxynet_forward.1} parent=11 // pred_check_branch
        %189 = sbr.rel (%p187) target = $region28
      $region27: #{proxynet_forward.1} parent=11 // pred_region
        _
      $region28: #{proxynet_forward.1} parent=11 // pred_fallthru
        _
    $region12: #{proxynet_forward.1} parent=5 // pred_fallthru
      _
    %p190 = scmp.lt.s32.totalorder %s11, 2
    // Predicated region
    $region29: #{proxynet_forward.1} parent=5 // pred_check
      %p191 = pneg %p190
    $region30: #{proxynet_forward.1} parent=5 // pred_check_branch
      %193 = sbr.rel (%p191) target = $region32
    $region31: #{proxynet_forward.1} parent=5 // pred_region
      // Predicated region
      $region33: #{proxynet_forward.1} parent=31 // pred_check
        %p194 = pneg %p45
      $region34: #{proxynet_forward.1} parent=31 // pred_check_branch
        %196 = sbr.rel (%p194) target = $region36
      $region35: #{proxynet_forward.1} parent=31 // pred_region
        %s197 = smul.u32 2, %s19
        %p198 = scmp.lt.s32.totalorder %s18, 1
        %s199 = scalar_select %p198, %s18, 1
        %p200 = scmp.lt.s32.totalorder %s197, 1
        %s201 = scalar_select %p200, %s197, 1
        %s202 = smul.addr %s199, 64
        %s203 = sadd.s32 %s201, %s202
        %s204 = smul.addr %s203, 4
        %s205 = scalar_lea.vmem %s0, %s204
        %s206 = smul.u32 2, %s19
      $region36: #{proxynet_forward.1} parent=31 // pred_fallthru
        _
    $region32: #{proxynet_forward.1} parent=5 // pred_fallthru
      _
    %p207 = scmp.le.s32.totalorder 1, %s11
    %p208 = scmp.lt.s32.totalorder %s11, 3
    %p209 = pnand %p207, %p208
    %p210 = pneg %p209
    // Predicated region
    $region37: #{proxynet_forward.1} parent=5 // pred_check
      _
    $region38: #{proxynet_forward.1} parent=5 // pred_check_branch
      %212 = sbr.rel (%p209) target = $region40
    $region39: #{proxynet_forward.1} parent=5 // pred_region
      %s213 = ssub.s32 %s11, 1
      %s214 = smul.u32 2, %s21
      %p215 = scmp.lt.s32.totalorder %s20, 1
      %s216 = scalar_select %p215, %s20, 1
      %p217 = scmp.lt.s32.totalorder %s214, 1
      %s218 = scalar_select %p217, %s214, 1
      %s219 = smul.addr %s216, 64
      %s220 = sadd.s32 %s218, %s219
      %s221 = smul.addr %s220, 4
      %s222 = scalar_lea.vmem %s0, %s221
      %p223 = pneg %p51
      %p224 = pneg %p48
      %p225 = pneg %p72
      %p226 = pneg %p69
      %p227 = pneg %p93
      %p228 = pneg %p90
      %p229 = pneg %p114
      %p230 = pneg %p111
      %p231 = pneg %p135
      %p232 = pneg %p132
      %p233 = pneg %p163
      %p234 = pneg %p160
      %s235 = smul.u32 2, %s21
      %p236 = scmp.lt.s32.totalorder %s20, 1
      %s237 = scalar_select %p236, %s20, 1
      %p238 = scmp.lt.s32.totalorder %s235, 1
      %s239 = scalar_select %p238, %s235, 1
      %s240 = smul.addr %s237, 8
      %s241 = sadd.s32 %s239, %s240
      %s242 = smul.addr %s241, 8
      %s243 = scalar_lea.vmem %s5, %s242
      %s244 = smul.u32 2, %s21
      %p245 = scmp.lt.s32.totalorder %s20, 1
      %s246 = scalar_select %p245, %s20, 1
      %p247 = scmp.lt.s32.totalorder %s244, 1
      %s248 = scalar_select %p247, %s244, 1
      %s249 = smul.addr %s246, 64
      %s250 = sadd.s32 %s248, %s249
      %s251 = smul.addr %s250, 4
      %s252 = scalar_lea.vmem %s0, %s251
      %s253 = smul.u32 2, %s21
      %s254 = smul.u32 2, %s21
      %p255 = scmp.lt.s32.totalorder %s20, 1
      %s256 = scalar_select %p255, %s20, 1
      %p257 = scmp.lt.s32.totalorder %s254, 1
      %s258 = scalar_select %p257, %s254, 1
      %s259 = smul.addr %s256, 8
      %s260 = sadd.s32 %s258, %s259
      %s261 = smul.addr %s260, 8
      %s262 = scalar_lea.vmem %s5, %s261
      %s263 = smul.u32 2, %s21
      %v264 = vld [vmem:[%s1] sm:$0xff]
      %v265 = vld [vmem:[%s1 + $0x8] sm:$0xff]
      %v266 = vld [vmem:[%s1 + $0x10] sm:$0xff]
      %v267 = vld [vmem:[%s1 + $0x18] sm:$0xff]
      %v268 = vld [vmem:[%s1 + $0x20] sm:$0xff]
      %v269 = vld [vmem:[%s1 + $0x28] sm:$0xff]
      %v270 = vld [vmem:[%s1 + $0x30] sm:$0xff]
      %v271 = vld [vmem:[%s1 + $0x38] sm:$0xff]
      %v272 = vld [vmem:[%s1 + $0x40] sm:$0xff]
      %v273 = vld [vmem:[%s1 + $0x48] sm:$0xff]
      %v274 = vld [vmem:[%s1 + $0x50] sm:$0xff]
      %v275 = vld [vmem:[%s1 + $0x58] sm:$0xff]
      %v276 = vld [vmem:[%s1 + $0x60] sm:$0xff]
      %v277 = vld [vmem:[%s1 + $0x68] sm:$0xff]
      %v278 = vld [vmem:[%s1 + $0x70] sm:$0xff]
      %v279 = vld [vmem:[%s1 + $0x78] sm:$0xff]
      %v280 = vld [vmem:[%s1 + $0x80] sm:$0xff]
      %v281 = vld [vmem:[%s1 + $0x88] sm:$0xff]
      %v282 = vld [vmem:[%s1 + $0x90] sm:$0xff]
      %v283 = vld [vmem:[%s1 + $0x98] sm:$0xff]
      %v284 = vld [vmem:[%s1 + $0xa0] sm:$0xff]
      %v285 = vld [vmem:[%s1 + $0xa8] sm:$0xff]
      %v286 = vld [vmem:[%s1 + $0xb0] sm:$0xff]
      %v287 = vld [vmem:[%s1 + $0xb8] sm:$0xff]
      %v288 = vld [vmem:[%s1 + $0xc0] sm:$0xff]
      %v289 = vld [vmem:[%s1 + $0xc8] sm:$0xff]
      %v290 = vld [vmem:[%s1 + $0xd0] sm:$0xff]
      %v291 = vld [vmem:[%s1 + $0xd8] sm:$0xff]
      %v292 = vld [vmem:[%s1 + $0xe0] sm:$0xff]
      %v293 = vld [vmem:[%s1 + $0xe8] sm:$0xff]
      %v294 = vld [vmem:[%s1 + $0xf0] sm:$0xff]
      %v295 = vld [vmem:[%s1 + $0xf8] sm:$0xff]
      %v296 = vld [vmem:[%s3] sm:$0xff]
      %v297 = vld [vmem:[%s3 + $0x8] sm:$0xff]
      %v298 = vld [vmem:[%s3 + $0x10] sm:$0xff]
      %v299 = vld [vmem:[%s3 + $0x18] sm:$0xff]
      %v300 = vld [vmem:[%s2] sm:$0xff]
      %v301 = vld [vmem:[%s2 + $0x8] sm:$0xff]
      %v302 = vld [vmem:[%s2 + $0x10] sm:$0xff]
      %v303 = vld [vmem:[%s2 + $0x18] sm:$0xff]
      %v304 = vld [vmem:[%s2 + $0x20] sm:$0xff]
      %v305 = vld [vmem:[%s2 + $0x28] sm:$0xff]
      %v306 = vld [vmem:[%s2 + $0x30] sm:$0xff]
      %v307 = vld [vmem:[%s2 + $0x38] sm:$0xff]
      %v308 = vld [vmem:[%s2 + $0x40] sm:$0xff]
      %v309 = vld [vmem:[%s2 + $0x48] sm:$0xff]
      %v310 = vld [vmem:[%s2 + $0x50] sm:$0xff]
      %v311 = vld [vmem:[%s2 + $0x58] sm:$0xff]
      %v312 = vld [vmem:[%s2 + $0x60] sm:$0xff]
      %v313 = vld [vmem:[%s2 + $0x68] sm:$0xff]
      %v314 = vld [vmem:[%s2 + $0x70] sm:$0xff]
      %v315 = vld [vmem:[%s2 + $0x78] sm:$0xff]
      %v316 = vld [vmem:[%s2 + $0x80] sm:$0xff]
      %v317 = vld [vmem:[%s2 + $0x88] sm:$0xff]
      %v318 = vld [vmem:[%s2 + $0x90] sm:$0xff]
      %v319 = vld [vmem:[%s2 + $0x98] sm:$0xff]
      %v320 = vld [vmem:[%s2 + $0xa0] sm:$0xff]
      %v321 = vld [vmem:[%s2 + $0xa8] sm:$0xff]
      %v322 = vld [vmem:[%s2 + $0xb0] sm:$0xff]
      %v323 = vld [vmem:[%s2 + $0xb8] sm:$0xff]
      %v324 = vld [vmem:[%s2 + $0xc0] sm:$0xff]
      %v325 = vld [vmem:[%s2 + $0xc8] sm:$0xff]
      %v326 = vld [vmem:[%s2 + $0xd0] sm:$0xff]
      %v327 = vld [vmem:[%s2 + $0xd8] sm:$0xff]
      %v328 = vld [vmem:[%s2 + $0xe0] sm:$0xff]
      %v329 = vld [vmem:[%s2 + $0xe8] sm:$0xff]
      %v330 = vld [vmem:[%s2 + $0xf0] sm:$0xff]
      %v331 = vld [vmem:[%s2 + $0xf8] sm:$0xff]
      %v332 = vld [vmem:[%s4] sm:$0xff]
      %v333 = vld [vmem:[%s4 + $0x8] sm:$0xff]
      %v334 = vld [vmem:[%s4 + $0x10] sm:$0xff]
      %v335 = vld [vmem:[%s4 + $0x18] sm:$0xff]
      %v336 = vld [vmem:[%s252] sm:$0xff]
      %v337 = vld [vmem:[%s252 + $0x8] sm:$0xff]
      %v338 = vld [vmem:[%s252 + $0x10] sm:$0xff]
      %v339 = vld [vmem:[%s252 + $0x18] sm:$0xff]
      %v340 = vld [vmem:[%s252 + $0x20] sm:$0xff]
      %v341 = vld [vmem:[%s252 + $0x28] sm:$0xff]
      %v342 = vld [vmem:[%s252 + $0x30] sm:$0xff]
      %v343 = vld [vmem:[%s252 + $0x38] sm:$0xff]
      %v344 = vld [vmem:[%s252 + $0x40] sm:$0xff]
      %v345 = vld [vmem:[%s252 + $0x48] sm:$0xff]
      %v346 = vld [vmem:[%s252 + $0x50] sm:$0xff]
      %v347 = vld [vmem:[%s252 + $0x58] sm:$0xff]
      %v348 = vld [vmem:[%s252 + $0x60] sm:$0xff]
      %v349 = vld [vmem:[%s252 + $0x68] sm:$0xff]
      %v350 = vld [vmem:[%s252 + $0x70] sm:$0xff]
      %v351 = vld [vmem:[%s252 + $0x78] sm:$0xff]
      %v352 = vld [vmem:[%s252 + $0x80] sm:$0xff]
      %v353 = vld [vmem:[%s252 + $0x88] sm:$0xff]
      %v354 = vld [vmem:[%s252 + $0x90] sm:$0xff]
      %v355 = vld [vmem:[%s252 + $0x98] sm:$0xff]
      %v356 = vld [vmem:[%s252 + $0xa0] sm:$0xff]
      %v357 = vld [vmem:[%s252 + $0xa8] sm:$0xff]
      %v358 = vld [vmem:[%s252 + $0xb0] sm:$0xff]
      %v359 = vld [vmem:[%s252 + $0xb8] sm:$0xff]
      %v360 = vld [vmem:[%s252 + $0xc0] sm:$0xff]
      %v361 = vld [vmem:[%s252 + $0xc8] sm:$0xff]
      %v362 = vld [vmem:[%s252 + $0xd0] sm:$0xff]
      %v363 = vld [vmem:[%s252 + $0xd8] sm:$0xff]
      %v364 = vld [vmem:[%s252 + $0xe0] sm:$0xff]
      %v365 = vld [vmem:[%s252 + $0xe8] sm:$0xff]
      %v366 = vld [vmem:[%s252 + $0xf0] sm:$0xff]
      %v367 = vld [vmem:[%s252 + $0xf8] sm:$0xff]
      %369 = vset.pattern.permute.xlu0 0
      %370 = vperm.xlu0 %369, %v300
      %v371 = vpop.permute.xlu0 %370
      %374 = vset.pattern.permute.xlu0 0
      %375 = vperm.xlu0 %374, %v301
      %v376 = vpop.permute.xlu0 %375
      %379 = vset.pattern.permute.xlu0 0
      %380 = vperm.xlu0 %379, %v302
      %v381 = vpop.permute.xlu0 %380
      %384 = vset.pattern.permute.xlu0 0
      %385 = vperm.xlu0 %384, %v303
      %v386 = vpop.permute.xlu0 %385
      %389 = vset.pattern.permute.xlu0 0
      %390 = vperm.xlu0 %389, %v304
      %v391 = vpop.permute.xlu0 %390
      %394 = vset.pattern.permute.xlu0 0
      %395 = vperm.xlu0 %394, %v305
      %v396 = vpop.permute.xlu0 %395
      %399 = vset.pattern.permute.xlu0 0
      %400 = vperm.xlu0 %399, %v306
      %v401 = vpop.permute.xlu0 %400
      %404 = vset.pattern.permute.xlu0 0
      %405 = vperm.xlu0 %404, %v307
      %v406 = vpop.permute.xlu0 %405
      %409 = vset.pattern.permute.xlu0 0
      %410 = vperm.xlu0 %409, %v308
      %v411 = vpop.permute.xlu0 %410
      %414 = vset.pattern.permute.xlu0 0
      %415 = vperm.xlu0 %414, %v309
      %v416 = vpop.permute.xlu0 %415
      %419 = vset.pattern.permute.xlu0 0
      %420 = vperm.xlu0 %419, %v310
      %v421 = vpop.permute.xlu0 %420
      %424 = vset.pattern.permute.xlu0 0
      %425 = vperm.xlu0 %424, %v311
      %v426 = vpop.permute.xlu0 %425
      %429 = vset.pattern.permute.xlu0 0
      %430 = vperm.xlu0 %429, %v312
      %v431 = vpop.permute.xlu0 %430
      %434 = vset.pattern.permute.xlu0 0
      %435 = vperm.xlu0 %434, %v313
      %v436 = vpop.permute.xlu0 %435
      %439 = vset.pattern.permute.xlu0 0
      %440 = vperm.xlu0 %439, %v314
      %v441 = vpop.permute.xlu0 %440
      %444 = vset.pattern.permute.xlu0 0
      %445 = vperm.xlu0 %444, %v315
      %v446 = vpop.permute.xlu0 %445
      %449 = vset.pattern.permute.xlu0 0
      %450 = vperm.xlu0 %449, %v316
      %v451 = vpop.permute.xlu0 %450
      %454 = vset.pattern.permute.xlu0 0
      %455 = vperm.xlu0 %454, %v317
      %v456 = vpop.permute.xlu0 %455
      %459 = vset.pattern.permute.xlu0 0
      %460 = vperm.xlu0 %459, %v318
      %v461 = vpop.permute.xlu0 %460
      %464 = vset.pattern.permute.xlu0 0
      %465 = vperm.xlu0 %464, %v319
      %v466 = vpop.permute.xlu0 %465
      %469 = vset.pattern.permute.xlu0 0
      %470 = vperm.xlu0 %469, %v320
      %v471 = vpop.permute.xlu0 %470
      %474 = vset.pattern.permute.xlu0 0
      %475 = vperm.xlu0 %474, %v321
      %v476 = vpop.permute.xlu0 %475
      %479 = vset.pattern.permute.xlu0 0
      %480 = vperm.xlu0 %479, %v322
      %v481 = vpop.permute.xlu0 %480
      %484 = vset.pattern.permute.xlu0 0
      %485 = vperm.xlu0 %484, %v323
      %v486 = vpop.permute.xlu0 %485
      %489 = vset.pattern.permute.xlu0 0
      %490 = vperm.xlu0 %489, %v324
      %v491 = vpop.permute.xlu0 %490
      %494 = vset.pattern.permute.xlu0 0
      %495 = vperm.xlu0 %494, %v325
      %v496 = vpop.permute.xlu0 %495
      %499 = vset.pattern.permute.xlu0 0
      %500 = vperm.xlu0 %499, %v326
      %v501 = vpop.permute.xlu0 %500
      %504 = vset.pattern.permute.xlu0 0
      %505 = vperm.xlu0 %504, %v327
      %v506 = vpop.permute.xlu0 %505
      %509 = vset.pattern.permute.xlu0 0
      %510 = vperm.xlu0 %509, %v328
      %v511 = vpop.permute.xlu0 %510
      %514 = vset.pattern.permute.xlu0 0
      %515 = vperm.xlu0 %514, %v329
      %v516 = vpop.permute.xlu0 %515
      %519 = vset.pattern.permute.xlu0 0
      %520 = vperm.xlu0 %519, %v330
      %v521 = vpop.permute.xlu0 %520
      %524 = vset.pattern.permute.xlu0 0
      %525 = vperm.xlu0 %524, %v331
      %v526 = vpop.permute.xlu0 %525
      %v560 = vunpack.c.l.b16 %v264
      %v561 = vunpack.c.h.b16 %v264
      %v562 = vunpack.c.l.b16 %v265
      %v563 = vunpack.c.h.b16 %v265
      %v564 = vunpack.c.l.b16 %v266
      %v565 = vunpack.c.h.b16 %v266
      %v566 = vunpack.c.l.b16 %v267
      %v567 = vunpack.c.h.b16 %v267
      %v568 = vunpack.c.l.b16 %v268
      %v569 = vunpack.c.h.b16 %v268
      %v570 = vunpack.c.l.b16 %v269
      %v571 = vunpack.c.h.b16 %v269
      %v572 = vunpack.c.l.b16 %v270
      %v573 = vunpack.c.h.b16 %v270
      %v574 = vunpack.c.l.b16 %v271
      %v575 = vunpack.c.h.b16 %v271
      %v576 = vunpack.c.l.b16 %v272
      %v577 = vunpack.c.h.b16 %v272
      %v578 = vunpack.c.l.b16 %v273
      %v579 = vunpack.c.h.b16 %v273
      %v580 = vunpack.c.l.b16 %v274
      %v581 = vunpack.c.h.b16 %v274
      %v582 = vunpack.c.l.b16 %v275
      %v583 = vunpack.c.h.b16 %v275
      %v584 = vunpack.c.l.b16 %v276
      %v585 = vunpack.c.h.b16 %v276
      %v586 = vunpack.c.l.b16 %v277
      %v587 = vunpack.c.h.b16 %v277
      %v588 = vunpack.c.l.b16 %v278
      %v589 = vunpack.c.h.b16 %v278
      %v590 = vunpack.c.l.b16 %v279
      %v591 = vunpack.c.h.b16 %v279
      %v592 = vunpack.c.l.b16 %v280
      %v593 = vunpack.c.h.b16 %v280
      %v594 = vunpack.c.l.b16 %v281
      %v595 = vunpack.c.h.b16 %v281
      %v596 = vunpack.c.l.b16 %v282
      %v597 = vunpack.c.h.b16 %v282
      %v598 = vunpack.c.l.b16 %v283
      %v599 = vunpack.c.h.b16 %v283
      %v600 = vunpack.c.l.b16 %v284
      %v601 = vunpack.c.h.b16 %v284
      %v602 = vunpack.c.l.b16 %v285
      %v603 = vunpack.c.h.b16 %v285
      %v604 = vunpack.c.l.b16 %v286
      %v605 = vunpack.c.h.b16 %v286
      %v606 = vunpack.c.l.b16 %v287
      %v607 = vunpack.c.h.b16 %v287
      %v608 = vunpack.c.l.b16 %v288
      %v609 = vunpack.c.h.b16 %v288
      %v610 = vunpack.c.l.b16 %v289
      %v611 = vunpack.c.h.b16 %v289
      %v612 = vunpack.c.l.b16 %v290
      %v613 = vunpack.c.h.b16 %v290
      %v614 = vunpack.c.l.b16 %v291
      %v615 = vunpack.c.h.b16 %v291
      %v616 = vunpack.c.l.b16 %v292
      %v617 = vunpack.c.h.b16 %v292
      %v618 = vunpack.c.l.b16 %v293
      %v619 = vunpack.c.h.b16 %v293
      %v620 = vunpack.c.l.b16 %v294
      %v621 = vunpack.c.h.b16 %v294
      %v622 = vunpack.c.l.b16 %v295
      %v623 = vunpack.c.h.b16 %v295
      %v624 = vpack.c.b16 %v562, %v560
      %v625 = vpack.c.b16 %v563, %v561
      %v626 = vpack.c.b16 %v566, %v564
      %v627 = vpack.c.b16 %v567, %v565
      %v628 = vpack.c.b16 %v570, %v568
      %v629 = vpack.c.b16 %v571, %v569
      %v630 = vpack.c.b16 %v574, %v572
      %v631 = vpack.c.b16 %v575, %v573
      %v632 = vpack.c.b16 %v578, %v576
      %v633 = vpack.c.b16 %v579, %v577
      %v634 = vpack.c.b16 %v582, %v580
      %v635 = vpack.c.b16 %v583, %v581
      %v636 = vpack.c.b16 %v586, %v584
      %v637 = vpack.c.b16 %v587, %v585
      %v638 = vpack.c.b16 %v590, %v588
      %v639 = vpack.c.b16 %v591, %v589
      %v640 = vpack.c.b16 %v594, %v592
      %v641 = vpack.c.b16 %v595, %v593
      %v642 = vpack.c.b16 %v598, %v596
      %v643 = vpack.c.b16 %v599, %v597
      %v644 = vpack.c.b16 %v602, %v600
      %v645 = vpack.c.b16 %v603, %v601
      %v646 = vpack.c.b16 %v606, %v604
      %v647 = vpack.c.b16 %v607, %v605
      %v648 = vpack.c.b16 %v610, %v608
      %v649 = vpack.c.b16 %v611, %v609
      %v650 = vpack.c.b16 %v614, %v612
      %v651 = vpack.c.b16 %v615, %v613
      %v652 = vpack.c.b16 %v618, %v616
      %v653 = vpack.c.b16 %v619, %v617
      %v654 = vpack.c.b16 %v622, %v620
      %v655 = vpack.c.b16 %v623, %v621
      %v720 = vunpack.c.l.b16 %v336
      %v721 = vunpack.c.h.b16 %v336
      %v722 = vunpack.c.l.b16 %v337
      %v723 = vunpack.c.h.b16 %v337
      %v724 = vunpack.c.l.b16 %v338
      %v725 = vunpack.c.h.b16 %v338
      %v726 = vunpack.c.l.b16 %v339
      %v727 = vunpack.c.h.b16 %v339
      %v728 = vunpack.c.l.b16 %v340
      %v729 = vunpack.c.h.b16 %v340
      %v730 = vunpack.c.l.b16 %v341
      %v731 = vunpack.c.h.b16 %v341
      %v732 = vunpack.c.l.b16 %v342
      %v733 = vunpack.c.h.b16 %v342
      %v734 = vunpack.c.l.b16 %v343
      %v735 = vunpack.c.h.b16 %v343
      %v736 = vunpack.c.l.b16 %v344
      %v737 = vunpack.c.h.b16 %v344
      %v738 = vunpack.c.l.b16 %v345
      %v739 = vunpack.c.h.b16 %v345
      %v740 = vunpack.c.l.b16 %v346
      %v741 = vunpack.c.h.b16 %v346
      %v742 = vunpack.c.l.b16 %v347
      %v743 = vunpack.c.h.b16 %v347
      %v744 = vunpack.c.l.b16 %v348
      %v745 = vunpack.c.h.b16 %v348
      %v746 = vunpack.c.l.b16 %v349
      %v747 = vunpack.c.h.b16 %v349
      %v748 = vunpack.c.l.b16 %v350
      %v749 = vunpack.c.h.b16 %v350
      %v750 = vunpack.c.l.b16 %v351
      %v751 = vunpack.c.h.b16 %v351
      %v752 = vunpack.c.l.b16 %v352
      %v753 = vunpack.c.h.b16 %v352
      %v754 = vunpack.c.l.b16 %v353
      %v755 = vunpack.c.h.b16 %v353
      %v756 = vunpack.c.l.b16 %v354
      %v757 = vunpack.c.h.b16 %v354
      %v758 = vunpack.c.l.b16 %v355
      %v759 = vunpack.c.h.b16 %v355
      %v760 = vunpack.c.l.b16 %v356
      %v761 = vunpack.c.h.b16 %v356
      %v762 = vunpack.c.l.b16 %v357
      %v763 = vunpack.c.h.b16 %v357
      %v764 = vunpack.c.l.b16 %v358
      %v765 = vunpack.c.h.b16 %v358
      %v766 = vunpack.c.l.b16 %v359
      %v767 = vunpack.c.h.b16 %v359
      %v768 = vunpack.c.l.b16 %v360
      %v769 = vunpack.c.h.b16 %v360
      %v770 = vunpack.c.l.b16 %v361
      %v771 = vunpack.c.h.b16 %v361
      %v772 = vunpack.c.l.b16 %v362
      %v773 = vunpack.c.h.b16 %v362
      %v774 = vunpack.c.l.b16 %v363
      %v775 = vunpack.c.h.b16 %v363
      %v776 = vunpack.c.l.b16 %v364
      %v777 = vunpack.c.h.b16 %v364
      %v778 = vunpack.c.l.b16 %v365
      %v779 = vunpack.c.h.b16 %v365
      %v780 = vunpack.c.l.b16 %v366
      %v781 = vunpack.c.h.b16 %v366
      %v782 = vunpack.c.l.b16 %v367
      %v783 = vunpack.c.h.b16 %v367
      %v784 = vpack.c.b16 %v722, %v720
      %v785 = vpack.c.b16 %v723, %v721
      %v786 = vpack.c.b16 %v726, %v724
      %v787 = vpack.c.b16 %v727, %v725
      %v788 = vpack.c.b16 %v730, %v728
      %v789 = vpack.c.b16 %v731, %v729
      %v790 = vpack.c.b16 %v734, %v732
      %v791 = vpack.c.b16 %v735, %v733
      %v792 = vpack.c.b16 %v738, %v736
      %v793 = vpack.c.b16 %v739, %v737
      %v794 = vpack.c.b16 %v742, %v740
      %v795 = vpack.c.b16 %v743, %v741
      %v796 = vpack.c.b16 %v746, %v744
      %v797 = vpack.c.b16 %v747, %v745
      %v798 = vpack.c.b16 %v750, %v748
      %v799 = vpack.c.b16 %v751, %v749
      %v800 = vpack.c.b16 %v754, %v752
      %v801 = vpack.c.b16 %v755, %v753
      %v802 = vpack.c.b16 %v758, %v756
      %v803 = vpack.c.b16 %v759, %v757
      %v804 = vpack.c.b16 %v762, %v760
      %v805 = vpack.c.b16 %v763, %v761
      %v806 = vpack.c.b16 %v766, %v764
      %v807 = vpack.c.b16 %v767, %v765
      %v808 = vpack.c.b16 %v770, %v768
      %v809 = vpack.c.b16 %v771, %v769
      %v810 = vpack.c.b16 %v774, %v772
      %v811 = vpack.c.b16 %v775, %v773
      %v812 = vpack.c.b16 %v778, %v776
      %v813 = vpack.c.b16 %v779, %v777
      %v814 = vpack.c.b16 %v782, %v780
      %v815 = vpack.c.b16 %v783, %v781
      %848 = vmatpush.bf16.msra.mxu0 %v798
      %849 = vmatpush.bf16.msra.mxu0 %v796
      %850 = vmatpush.bf16.msra.mxu0 %v794
      %851 = vmatpush.bf16.msra.mxu0 %v792
      %852 = vmatpush.bf16.msra.mxu0 %v790
      %853 = vmatpush.bf16.msra.mxu0 %v788
      %854 = vmatpush.bf16.msra.mxu0 %v786
      %855 = vmatpush.bf16.msra.mxu0 %v784
      %856 = vmatmul.bf16.gmra.mxu0 %v624
      %v857 = vpop.f32.mrf.mxu0
      %v858 = vadd.f32 %v371, %v857
      %v859 = vpop.f32.mrf.mxu0
      %v860 = vadd.f32 %v376, %v859
      %861 = vmatmul.bf16.gmra.mxu0 %v626
      %v862 = vpop.f32.mrf.mxu0
      %v863 = vadd.f32 %v381, %v862
      %v864 = vpop.f32.mrf.mxu0
      %v865 = vadd.f32 %v386, %v864
      %866 = vmatmul.bf16.gmra.mxu0 %v628
      %v867 = vpop.f32.mrf.mxu0
      %v868 = vadd.f32 %v391, %v867
      %v869 = vpop.f32.mrf.mxu0
      %v870 = vadd.f32 %v396, %v869
      %871 = vmatmul.bf16.gmra.mxu0 %v630
      %v872 = vpop.f32.mrf.mxu0
      %v873 = vadd.f32 %v401, %v872
      %v874 = vpop.f32.mrf.mxu0
      %v875 = vadd.f32 %v406, %v874
      %876 = vmatmul.bf16.gmra.mxu0 %v632
      %v877 = vpop.f32.mrf.mxu0
      %v878 = vadd.f32 %v411, %v877
      %v879 = vpop.f32.mrf.mxu0
      %v880 = vadd.f32 %v416, %v879
      %881 = vmatmul.bf16.gmra.mxu0 %v634
      %v882 = vpop.f32.mrf.mxu0
      %v883 = vadd.f32 %v421, %v882
      %v884 = vpop.f32.mrf.mxu0
      %v885 = vadd.f32 %v426, %v884
      %886 = vmatmul.bf16.gmra.mxu0 %v636
      %v887 = vpop.f32.mrf.mxu0
      %v888 = vadd.f32 %v431, %v887
      %v889 = vpop.f32.mrf.mxu0
      %v890 = vadd.f32 %v436, %v889
      %891 = vmatmul.bf16.gmra.mxu0 %v638
      %v892 = vpop.f32.mrf.mxu0
      %v893 = vadd.f32 %v441, %v892
      %v894 = vpop.f32.mrf.mxu0
      %v895 = vadd.f32 %v446, %v894
      %896 = vmatmul.bf16.gmra.mxu0 %v640
      %v897 = vpop.f32.mrf.mxu0
      %v898 = vadd.f32 %v451, %v897
      %v899 = vpop.f32.mrf.mxu0
      %v900 = vadd.f32 %v456, %v899
      %901 = vmatmul.bf16.gmra.mxu0 %v642
      %v902 = vpop.f32.mrf.mxu0
      %v903 = vadd.f32 %v461, %v902
      %v904 = vpop.f32.mrf.mxu0
      %v905 = vadd.f32 %v466, %v904
      %906 = vmatmul.bf16.gmra.mxu0 %v644
      %v907 = vpop.f32.mrf.mxu0
      %v908 = vadd.f32 %v471, %v907
      %v909 = vpop.f32.mrf.mxu0
      %v910 = vadd.f32 %v476, %v909
      %911 = vmatmul.bf16.gmra.mxu0 %v646
      %v912 = vpop.f32.mrf.mxu0
      %v913 = vadd.f32 %v481, %v912
      %v914 = vpop.f32.mrf.mxu0
      %v915 = vadd.f32 %v486, %v914
      %916 = vmatmul.bf16.gmra.mxu0 %v648
      %v917 = vpop.f32.mrf.mxu0
      %v918 = vadd.f32 %v491, %v917
      %v919 = vpop.f32.mrf.mxu0
      %v920 = vadd.f32 %v496, %v919
      %921 = vmatmul.bf16.gmra.mxu0 %v650
      %v922 = vpop.f32.mrf.mxu0
      %v923 = vadd.f32 %v501, %v922
      %v924 = vpop.f32.mrf.mxu0
      %v925 = vadd.f32 %v506, %v924
      %926 = vmatmul.bf16.gmra.mxu0 %v652
      %v927 = vpop.f32.mrf.mxu0
      %v928 = vadd.f32 %v511, %v927
      %v929 = vpop.f32.mrf.mxu0
      %v930 = vadd.f32 %v516, %v929
      %931 = vmatmul.bf16.gmra.mxu0 %v654
      %v932 = vpop.f32.mrf.mxu0
      %v933 = vadd.f32 %v521, %v932
      %v934 = vpop.f32.mrf.mxu0
      %v935 = vadd.f32 %v526, %v934
      %936 = vdwg.mxu0
      %937 = vmatpush.bf16.msra.mxu0 %v814
      %938 = vmatpush.bf16.msra.mxu0 %v812
      %939 = vmatpush.bf16.msra.mxu0 %v810
      %940 = vmatpush.bf16.msra.mxu0 %v808
      %941 = vmatpush.bf16.msra.mxu0 %v806
      %942 = vmatpush.bf16.msra.mxu0 %v804
      %943 = vmatpush.bf16.msra.mxu0 %v802
      %944 = vmatpush.bf16.msra.mxu0 %v800
      %945 = vmatmul.bf16.gmra.mxu0 %v625
      %v946 = vpop.f32.mrf.mxu0
      %v947 = vadd.f32 %v858, %v946
      %v948 = vpop.f32.mrf.mxu0
      %v949 = vadd.f32 %v860, %v948
      %950 = vmatmul.bf16.gmra.mxu0 %v627
      %v951 = vpop.f32.mrf.mxu0
      %v952 = vadd.f32 %v863, %v951
      %v953 = vpop.f32.mrf.mxu0
      %v954 = vadd.f32 %v865, %v953
      %955 = vmatmul.bf16.gmra.mxu0 %v629
      %v956 = vpop.f32.mrf.mxu0
      %v957 = vadd.f32 %v868, %v956
      %v958 = vpop.f32.mrf.mxu0
      %v959 = vadd.f32 %v870, %v958
      %960 = vmatmul.bf16.gmra.mxu0 %v631
      %v961 = vpop.f32.mrf.mxu0
      %v962 = vadd.f32 %v873, %v961
      %v963 = vpop.f32.mrf.mxu0
      %v964 = vadd.f32 %v875, %v963
      %965 = vmatmul.bf16.gmra.mxu0 %v633
      %v966 = vpop.f32.mrf.mxu0
      %v967 = vadd.f32 %v878, %v966
      %v968 = vpop.f32.mrf.mxu0
      %v969 = vadd.f32 %v880, %v968
      %970 = vmatmul.bf16.gmra.mxu0 %v635
      %v971 = vpop.f32.mrf.mxu0
      %v972 = vadd.f32 %v883, %v971
      %v973 = vpop.f32.mrf.mxu0
      %v974 = vadd.f32 %v885, %v973
      %975 = vmatmul.bf16.gmra.mxu0 %v637
      %v976 = vpop.f32.mrf.mxu0
      %v977 = vadd.f32 %v888, %v976
      %v978 = vpop.f32.mrf.mxu0
      %v979 = vadd.f32 %v890, %v978
      %980 = vmatmul.bf16.gmra.mxu0 %v639
      %v981 = vpop.f32.mrf.mxu0
      %v982 = vadd.f32 %v893, %v981
      %v983 = vpop.f32.mrf.mxu0
      %v984 = vadd.f32 %v895, %v983
      %985 = vmatmul.bf16.gmra.mxu0 %v641
      %v986 = vpop.f32.mrf.mxu0
      %v987 = vadd.f32 %v898, %v986
      %v988 = vpop.f32.mrf.mxu0
      %v989 = vadd.f32 %v900, %v988
      %990 = vmatmul.bf16.gmra.mxu0 %v643
      %v991 = vpop.f32.mrf.mxu0
      %v992 = vadd.f32 %v903, %v991
      %v993 = vpop.f32.mrf.mxu0
      %v994 = vadd.f32 %v905, %v993
      %995 = vmatmul.bf16.gmra.mxu0 %v645
      %v996 = vpop.f32.mrf.mxu0
      %v997 = vadd.f32 %v908, %v996
      %v998 = vpop.f32.mrf.mxu0
      %v999 = vadd.f32 %v910, %v998
      %1000 = vmatmul.bf16.gmra.mxu0 %v647
      %v1001 = vpop.f32.mrf.mxu0
      %v1002 = vadd.f32 %v913, %v1001
      %v1003 = vpop.f32.mrf.mxu0
      %v1004 = vadd.f32 %v915, %v1003
      %1005 = vmatmul.bf16.gmra.mxu0 %v649
      %v1006 = vpop.f32.mrf.mxu0
      %v1007 = vadd.f32 %v918, %v1006
      %v1008 = vpop.f32.mrf.mxu0
      %v1009 = vadd.f32 %v920, %v1008
      %1010 = vmatmul.bf16.gmra.mxu0 %v651
      %v1011 = vpop.f32.mrf.mxu0
      %v1012 = vadd.f32 %v923, %v1011
      %v1013 = vpop.f32.mrf.mxu0
      %v1014 = vadd.f32 %v925, %v1013
      %1015 = vmatmul.bf16.gmra.mxu0 %v653
      %v1016 = vpop.f32.mrf.mxu0
      %v1017 = vadd.f32 %v928, %v1016
      %v1018 = vpop.f32.mrf.mxu0
      %v1019 = vadd.f32 %v930, %v1018
      %1020 = vmatmul.bf16.gmra.mxu0 %v655
      %v1021 = vpop.f32.mrf.mxu0
      %v1022 = vadd.f32 %v933, %v1021
      %v1023 = vpop.f32.mrf.mxu0
      %v1024 = vadd.f32 %v935, %v1023
      %1025 = vdwg.mxu0
      %1026 = vmatpush.bf16.msra.mxu0 %v799
      %1027 = vmatpush.bf16.msra.mxu0 %v797
      %1028 = vmatpush.bf16.msra.mxu0 %v795
      %1029 = vmatpush.bf16.msra.mxu0 %v793
      %1030 = vmatpush.bf16.msra.mxu0 %v791
      %1031 = vmatpush.bf16.msra.mxu0 %v789
      %1032 = vmatpush.bf16.msra.mxu0 %v787
      %1033 = vmatpush.bf16.msra.mxu0 %v785
      %1034 = vmatmul.bf16.gmra.mxu0 %v624
      %v1035 = vpop.f32.mrf.mxu0
      %v1036 = vadd.f32 %v371, %v1035
      %v1037 = vpop.f32.mrf.mxu0
      %v1038 = vadd.f32 %v376, %v1037
      %1039 = vmatmul.bf16.gmra.mxu0 %v626
      %v1040 = vpop.f32.mrf.mxu0
      %v1041 = vadd.f32 %v381, %v1040
      %v1042 = vpop.f32.mrf.mxu0
      %v1043 = vadd.f32 %v386, %v1042
      %1044 = vmatmul.bf16.gmra.mxu0 %v628
      %v1045 = vpop.f32.mrf.mxu0
      %v1046 = vadd.f32 %v391, %v1045
      %v1047 = vpop.f32.mrf.mxu0
      %v1048 = vadd.f32 %v396, %v1047
      %1049 = vmatmul.bf16.gmra.mxu0 %v630
      %v1050 = vpop.f32.mrf.mxu0
      %v1051 = vadd.f32 %v401, %v1050
      %v1052 = vpop.f32.mrf.mxu0
      %v1053 = vadd.f32 %v406, %v1052
      %1054 = vmatmul.bf16.gmra.mxu0 %v632
      %v1055 = vpop.f32.mrf.mxu0
      %v1056 = vadd.f32 %v411, %v1055
      %v1057 = vpop.f32.mrf.mxu0
      %v1058 = vadd.f32 %v416, %v1057
      %1059 = vmatmul.bf16.gmra.mxu0 %v634
      %v1060 = vpop.f32.mrf.mxu0
      %v1061 = vadd.f32 %v421, %v1060
      %v1062 = vpop.f32.mrf.mxu0
      %v1063 = vadd.f32 %v426, %v1062
      %1064 = vmatmul.bf16.gmra.mxu0 %v636
      %v1065 = vpop.f32.mrf.mxu0
      %v1066 = vadd.f32 %v431, %v1065
      %v1067 = vpop.f32.mrf.mxu0
      %v1068 = vadd.f32 %v436, %v1067
      %1069 = vmatmul.bf16.gmra.mxu0 %v638
      %v1070 = vpop.f32.mrf.mxu0
      %v1071 = vadd.f32 %v441, %v1070
      %v1072 = vpop.f32.mrf.mxu0
      %v1073 = vadd.f32 %v446, %v1072
      %1074 = vmatmul.bf16.gmra.mxu0 %v640
      %v1075 = vpop.f32.mrf.mxu0
      %v1076 = vadd.f32 %v451, %v1075
      %v1077 = vpop.f32.mrf.mxu0
      %v1078 = vadd.f32 %v456, %v1077
      %1079 = vmatmul.bf16.gmra.mxu0 %v642
      %v1080 = vpop.f32.mrf.mxu0
      %v1081 = vadd.f32 %v461, %v1080
      %v1082 = vpop.f32.mrf.mxu0
      %v1083 = vadd.f32 %v466, %v1082
      %1084 = vmatmul.bf16.gmra.mxu0 %v644
      %v1085 = vpop.f32.mrf.mxu0
      %v1086 = vadd.f32 %v471, %v1085
      %v1087 = vpop.f32.mrf.mxu0
      %v1088 = vadd.f32 %v476, %v1087
      %1089 = vmatmul.bf16.gmra.mxu0 %v646
      %v1090 = vpop.f32.mrf.mxu0
      %v1091 = vadd.f32 %v481, %v1090
      %v1092 = vpop.f32.mrf.mxu0
      %v1093 = vadd.f32 %v486, %v1092
      %1094 = vmatmul.bf16.gmra.mxu0 %v648
      %v1095 = vpop.f32.mrf.mxu0
      %v1096 = vadd.f32 %v491, %v1095
      %v1097 = vpop.f32.mrf.mxu0
      %v1098 = vadd.f32 %v496, %v1097
      %1099 = vmatmul.bf16.gmra.mxu0 %v650
      %v1100 = vpop.f32.mrf.mxu0
      %v1101 = vadd.f32 %v501, %v1100
      %v1102 = vpop.f32.mrf.mxu0
      %v1103 = vadd.f32 %v506, %v1102
      %1104 = vmatmul.bf16.gmra.mxu0 %v652
      %v1105 = vpop.f32.mrf.mxu0
      %v1106 = vadd.f32 %v511, %v1105
      %v1107 = vpop.f32.mrf.mxu0
      %v1108 = vadd.f32 %v516, %v1107
      %1109 = vmatmul.bf16.gmra.mxu0 %v654
      %v1110 = vpop.f32.mrf.mxu0
      %v1111 = vadd.f32 %v521, %v1110
      %v1112 = vpop.f32.mrf.mxu0
      %v1113 = vadd.f32 %v526, %v1112
      %1114 = vdwg.mxu0
      %1115 = vmatpush.bf16.msra.mxu0 %v815
      %1116 = vmatpush.bf16.msra.mxu0 %v813
      %1117 = vmatpush.bf16.msra.mxu0 %v811
      %1118 = vmatpush.bf16.msra.mxu0 %v809
      %1119 = vmatpush.bf16.msra.mxu0 %v807
      %1120 = vmatpush.bf16.msra.mxu0 %v805
      %1121 = vmatpush.bf16.msra.mxu0 %v803
      %1122 = vmatpush.bf16.msra.mxu0 %v801
      %1123 = vmatmul.bf16.gmra.mxu0 %v625
      %v1124 = vpop.f32.mrf.mxu0
      %v1125 = vadd.f32 %v1036, %v1124
      %v1126 = vpop.f32.mrf.mxu0
      %v1127 = vadd.f32 %v1038, %v1126
      %1128 = vmatmul.bf16.gmra.mxu0 %v627
      %v1129 = vpop.f32.mrf.mxu0
      %v1130 = vadd.f32 %v1041, %v1129
      %v1131 = vpop.f32.mrf.mxu0
      %v1132 = vadd.f32 %v1043, %v1131
      %1133 = vmatmul.bf16.gmra.mxu0 %v629
      %v1134 = vpop.f32.mrf.mxu0
      %v1135 = vadd.f32 %v1046, %v1134
      %v1136 = vpop.f32.mrf.mxu0
      %v1137 = vadd.f32 %v1048, %v1136
      %1138 = vmatmul.bf16.gmra.mxu0 %v631
      %v1139 = vpop.f32.mrf.mxu0
      %v1140 = vadd.f32 %v1051, %v1139
      %v1141 = vpop.f32.mrf.mxu0
      %v1142 = vadd.f32 %v1053, %v1141
      %1143 = vmatmul.bf16.gmra.mxu0 %v633
      %v1144 = vpop.f32.mrf.mxu0
      %v1145 = vadd.f32 %v1056, %v1144
      %v1146 = vpop.f32.mrf.mxu0
      %v1147 = vadd.f32 %v1058, %v1146
      %1148 = vmatmul.bf16.gmra.mxu0 %v635
      %v1149 = vpop.f32.mrf.mxu0
      %v1150 = vadd.f32 %v1061, %v1149
      %v1151 = vpop.f32.mrf.mxu0
      %v1152 = vadd.f32 %v1063, %v1151
      %1153 = vmatmul.bf16.gmra.mxu0 %v637
      %v1154 = vpop.f32.mrf.mxu0
      %v1155 = vadd.f32 %v1066, %v1154
      %v1156 = vpop.f32.mrf.mxu0
      %v1157 = vadd.f32 %v1068, %v1156
      %1158 = vmatmul.bf16.gmra.mxu0 %v639
      %v1159 = vpop.f32.mrf.mxu0
      %v1160 = vadd.f32 %v1071, %v1159
      %v1161 = vpop.f32.mrf.mxu0
      %v1162 = vadd.f32 %v1073, %v1161
      %1163 = vmatmul.bf16.gmra.mxu0 %v641
      %v1164 = vpop.f32.mrf.mxu0
      %v1165 = vadd.f32 %v1076, %v1164
      %v1166 = vpop.f32.mrf.mxu0
      %v1167 = vadd.f32 %v1078, %v1166
      %1168 = vmatmul.bf16.gmra.mxu0 %v643
      %v1169 = vpop.f32.mrf.mxu0
      %v1170 = vadd.f32 %v1081, %v1169
      %v1171 = vpop.f32.mrf.mxu0
      %v1172 = vadd.f32 %v1083, %v1171
      %1173 = vmatmul.bf16.gmra.mxu0 %v645
      %v1174 = vpop.f32.mrf.mxu0
      %v1175 = vadd.f32 %v1086, %v1174
      %v1176 = vpop.f32.mrf.mxu0
      %v1177 = vadd.f32 %v1088, %v1176
      %1178 = vmatmul.bf16.gmra.mxu0 %v647
      %v1179 = vpop.f32.mrf.mxu0
      %v1180 = vadd.f32 %v1091, %v1179
      %v1181 = vpop.f32.mrf.mxu0
      %v1182 = vadd.f32 %v1093, %v1181
      %1183 = vmatmul.bf16.gmra.mxu0 %v649
      %v1184 = vpop.f32.mrf.mxu0
      %v1185 = vadd.f32 %v1096, %v1184
      %v1186 = vpop.f32.mrf.mxu0
      %v1187 = vadd.f32 %v1098, %v1186
      %1188 = vmatmul.bf16.gmra.mxu0 %v651
      %v1189 = vpop.f32.mrf.mxu0
      %v1190 = vadd.f32 %v1101, %v1189
      %v1191 = vpop.f32.mrf.mxu0
      %v1192 = vadd.f32 %v1103, %v1191
      %1193 = vmatmul.bf16.gmra.mxu0 %v653
      %v1194 = vpop.f32.mrf.mxu0
      %v1195 = vadd.f32 %v1106, %v1194
      %v1196 = vpop.f32.mrf.mxu0
      %v1197 = vadd.f32 %v1108, %v1196
      %1198 = vmatmul.bf16.gmra.mxu0 %v655
      %v1199 = vpop.f32.mrf.mxu0
      %v1200 = vadd.f32 %v1111, %v1199
      %v1201 = vpop.f32.mrf.mxu0
      %v1202 = vadd.f32 %v1113, %v1201
      %1203 = vdwg.mxu0
      %v1204 = vmax.f32 %v947, 0.0
      %v1205 = vmax.f32 %v1125, 0.0
      %v1206 = vmax.f32 %v949, 0.0
      %v1207 = vmax.f32 %v1127, 0.0
      %v1208 = vmax.f32 %v952, 0.0
      %v1209 = vmax.f32 %v1130, 0.0
      %v1210 = vmax.f32 %v954, 0.0
      %v1211 = vmax.f32 %v1132, 0.0
      %v1212 = vmax.f32 %v957, 0.0
      %v1213 = vmax.f32 %v1135, 0.0
      %v1214 = vmax.f32 %v959, 0.0
      %v1215 = vmax.f32 %v1137, 0.0
      %v1216 = vmax.f32 %v962, 0.0
      %v1217 = vmax.f32 %v1140, 0.0
      %v1218 = vmax.f32 %v964, 0.0
      %v1219 = vmax.f32 %v1142, 0.0
      %v1220 = vmax.f32 %v967, 0.0
      %v1221 = vmax.f32 %v1145, 0.0
      %v1222 = vmax.f32 %v969, 0.0
      %v1223 = vmax.f32 %v1147, 0.0
      %v1224 = vmax.f32 %v972, 0.0
      %v1225 = vmax.f32 %v1150, 0.0
      %v1226 = vmax.f32 %v974, 0.0
      %v1227 = vmax.f32 %v1152, 0.0
      %v1228 = vmax.f32 %v977, 0.0
      %v1229 = vmax.f32 %v1155, 0.0
      %v1230 = vmax.f32 %v979, 0.0
      %v1231 = vmax.f32 %v1157, 0.0
      %v1232 = vmax.f32 %v982, 0.0
      %v1233 = vmax.f32 %v1160, 0.0
      %v1234 = vmax.f32 %v984, 0.0
      %v1235 = vmax.f32 %v1162, 0.0
      %v1236 = vmax.f32 %v987, 0.0
      %v1237 = vmax.f32 %v1165, 0.0
      %v1238 = vmax.f32 %v989, 0.0
      %v1239 = vmax.f32 %v1167, 0.0
      %v1240 = vmax.f32 %v992, 0.0
      %v1241 = vmax.f32 %v1170, 0.0
      %v1242 = vmax.f32 %v994, 0.0
      %v1243 = vmax.f32 %v1172, 0.0
      %v1244 = vmax.f32 %v997, 0.0
      %v1245 = vmax.f32 %v1175, 0.0
      %v1246 = vmax.f32 %v999, 0.0
      %v1247 = vmax.f32 %v1177, 0.0
      %v1248 = vmax.f32 %v1002, 0.0
      %v1249 = vmax.f32 %v1180, 0.0
      %v1250 = vmax.f32 %v1004, 0.0
      %v1251 = vmax.f32 %v1182, 0.0
      %v1252 = vmax.f32 %v1007, 0.0
      %v1253 = vmax.f32 %v1185, 0.0
      %v1254 = vmax.f32 %v1009, 0.0
      %v1255 = vmax.f32 %v1187, 0.0
      %v1256 = vmax.f32 %v1012, 0.0
      %v1257 = vmax.f32 %v1190, 0.0
      %v1258 = vmax.f32 %v1014, 0.0
      %v1259 = vmax.f32 %v1192, 0.0
      %v1260 = vmax.f32 %v1017, 0.0
      %v1261 = vmax.f32 %v1195, 0.0
      %v1262 = vmax.f32 %v1019, 0.0
      %v1263 = vmax.f32 %v1197, 0.0
      %v1264 = vmax.f32 %v1022, 0.0
      %v1265 = vmax.f32 %v1200, 0.0
      %v1266 = vmax.f32 %v1024, 0.0
      %v1267 = vmax.f32 %v1202, 0.0
      %v1268 = vpack.c.bf16 %v1206, %v1204
      %v1269 = vpack.c.bf16 %v1207, %v1205
      %v1270 = vpack.c.bf16 %v1210, %v1208
      %v1271 = vpack.c.bf16 %v1211, %v1209
      %v1272 = vpack.c.bf16 %v1214, %v1212
      %v1273 = vpack.c.bf16 %v1215, %v1213
      %v1274 = vpack.c.bf16 %v1218, %v1216
      %v1275 = vpack.c.bf16 %v1219, %v1217
      %v1276 = vpack.c.bf16 %v1222, %v1220
      %v1277 = vpack.c.bf16 %v1223, %v1221
      %v1278 = vpack.c.bf16 %v1226, %v1224
      %v1279 = vpack.c.bf16 %v1227, %v1225
      %v1280 = vpack.c.bf16 %v1230, %v1228
      %v1281 = vpack.c.bf16 %v1231, %v1229
      %v1282 = vpack.c.bf16 %v1234, %v1232
      %v1283 = vpack.c.bf16 %v1235, %v1233
      %v1284 = vpack.c.bf16 %v1238, %v1236
      %v1285 = vpack.c.bf16 %v1239, %v1237
      %v1286 = vpack.c.bf16 %v1242, %v1240
      %v1287 = vpack.c.bf16 %v1243, %v1241
      %v1288 = vpack.c.bf16 %v1246, %v1244
      %v1289 = vpack.c.bf16 %v1247, %v1245
      %v1290 = vpack.c.bf16 %v1250, %v1248
      %v1291 = vpack.c.bf16 %v1251, %v1249
      %v1292 = vpack.c.bf16 %v1254, %v1252
      %v1293 = vpack.c.bf16 %v1255, %v1253
      %v1294 = vpack.c.bf16 %v1258, %v1256
      %v1295 = vpack.c.bf16 %v1259, %v1257
      %v1296 = vpack.c.bf16 %v1262, %v1260
      %v1297 = vpack.c.bf16 %v1263, %v1261
      %v1298 = vpack.c.bf16 %v1266, %v1264
      %v1299 = vpack.c.bf16 %v1267, %v1265
      %1301 = vset.pattern.permute.xlu0 0
      %1302 = vperm.xlu0 %1301, %v332
      %v1303 = vpop.permute.xlu0 %1302
      %1306 = vset.pattern.permute.xlu0 0
      %1307 = vperm.xlu0 %1306, %v333
      %v1308 = vpop.permute.xlu0 %1307
      %1311 = vset.pattern.permute.xlu0 0
      %1312 = vperm.xlu0 %1311, %v334
      %v1313 = vpop.permute.xlu0 %1312
      %1316 = vset.pattern.permute.xlu0 0
      %1317 = vperm.xlu0 %1316, %v335
      %v1318 = vpop.permute.xlu0 %1317
      %v1324 = vunpack.c.l.b16 %v296
      %v1325 = vunpack.c.h.b16 %v296
      %v1326 = vunpack.c.l.b16 %v297
      %v1327 = vunpack.c.h.b16 %v297
      %v1328 = vunpack.c.l.b16 %v298
      %v1329 = vunpack.c.h.b16 %v298
      %v1330 = vunpack.c.l.b16 %v299
      %v1331 = vunpack.c.h.b16 %v299
      %v1332 = vpack.c.b16 %v1326, %v1324
      %v1333 = vpack.c.b16 %v1327, %v1325
      %v1334 = vpack.c.b16 %v1330, %v1328
      %v1335 = vpack.c.b16 %v1331, %v1329
      %1340 = vmatpush.bf16.msra.mxu0 %v1282
      %1341 = vmatpush.bf16.msra.mxu0 %v1280
      %1342 = vmatpush.bf16.msra.mxu0 %v1278
      %1343 = vmatpush.bf16.msra.mxu0 %v1276
      %1344 = vmatpush.bf16.msra.mxu0 %v1274
      %1345 = vmatpush.bf16.msra.mxu0 %v1272
      %1346 = vmatpush.bf16.msra.mxu0 %v1270
      %1347 = vmatpush.bf16.msra.mxu0 %v1268
      %1348 = vmatmul.bf16.gmra.mxu0 %v1332
      %v1349 = vpop.f32.mrf.mxu0
      %v1350 = vadd.f32 %v1303, %v1349
      %v1351 = vpop.f32.mrf.mxu0
      %v1352 = vadd.f32 %v1308, %v1351
      %1353 = vmatmul.bf16.gmra.mxu0 %v1334
      %v1354 = vpop.f32.mrf.mxu0
      %v1355 = vadd.f32 %v1313, %v1354
      %v1356 = vpop.f32.mrf.mxu0
      %v1357 = vadd.f32 %v1318, %v1356
      %1358 = vdwg.mxu0
      %1359 = vmatpush.bf16.msra.mxu0 %v1298
      %1360 = vmatpush.bf16.msra.mxu0 %v1296
      %1361 = vmatpush.bf16.msra.mxu0 %v1294
      %1362 = vmatpush.bf16.msra.mxu0 %v1292
      %1363 = vmatpush.bf16.msra.mxu0 %v1290
      %1364 = vmatpush.bf16.msra.mxu0 %v1288
      %1365 = vmatpush.bf16.msra.mxu0 %v1286
      %1366 = vmatpush.bf16.msra.mxu0 %v1284
      %1367 = vmatmul.bf16.gmra.mxu0 %v1333
      %v1368 = vpop.f32.mrf.mxu0
      %v1369 = vadd.f32 %v1350, %v1368
      %v1370 = vpop.f32.mrf.mxu0
      %v1371 = vadd.f32 %v1352, %v1370
      %1372 = vmatmul.bf16.gmra.mxu0 %v1335
      %v1373 = vpop.f32.mrf.mxu0
      %v1374 = vadd.f32 %v1355, %v1373
      %v1375 = vpop.f32.mrf.mxu0
      %v1376 = vadd.f32 %v1357, %v1375
      %1377 = vdwg.mxu0
      %1378 = vmatpush.bf16.msra.mxu0 %v1283
      %1379 = vmatpush.bf16.msra.mxu0 %v1281
      %1380 = vmatpush.bf16.msra.mxu0 %v1279
      %1381 = vmatpush.bf16.msra.mxu0 %v1277
      %1382 = vmatpush.bf16.msra.mxu0 %v1275
      %1383 = vmatpush.bf16.msra.mxu0 %v1273
      %1384 = vmatpush.bf16.msra.mxu0 %v1271
      %1385 = vmatpush.bf16.msra.mxu0 %v1269
      %1386 = vmatmul.bf16.gmra.mxu0 %v1332
      %v1387 = vpop.f32.mrf.mxu0
      %v1388 = vadd.f32 %v1303, %v1387
      %v1389 = vpop.f32.mrf.mxu0
      %v1390 = vadd.f32 %v1308, %v1389
      %1391 = vmatmul.bf16.gmra.mxu0 %v1334
      %v1392 = vpop.f32.mrf.mxu0
      %v1393 = vadd.f32 %v1313, %v1392
      %v1394 = vpop.f32.mrf.mxu0
      %v1395 = vadd.f32 %v1318, %v1394
      %1396 = vdwg.mxu0
      %1397 = vmatpush.bf16.msra.mxu0 %v1299
      %1398 = vmatpush.bf16.msra.mxu0 %v1297
      %1399 = vmatpush.bf16.msra.mxu0 %v1295
      %1400 = vmatpush.bf16.msra.mxu0 %v1293
      %1401 = vmatpush.bf16.msra.mxu0 %v1291
      %1402 = vmatpush.bf16.msra.mxu0 %v1289
      %1403 = vmatpush.bf16.msra.mxu0 %v1287
      %1404 = vmatpush.bf16.msra.mxu0 %v1285
      %1405 = vmatmul.bf16.gmra.mxu0 %v1333
      %v1406 = vpop.f32.mrf.mxu0
      %v1407 = vadd.f32 %v1388, %v1406
      %v1408 = vpop.f32.mrf.mxu0
      %v1409 = vadd.f32 %v1390, %v1408
      %1410 = vmatmul.bf16.gmra.mxu0 %v1335
      %v1411 = vpop.f32.mrf.mxu0
      %v1412 = vadd.f32 %v1393, %v1411
      %v1413 = vpop.f32.mrf.mxu0
      %v1414 = vadd.f32 %v1395, %v1413
      %1415 = vdwg.mxu0
      %1416 = vst [vmem:[%s262] sm:$0xff] %v1369
      %1417 = vst [vmem:[%s262 + $0x8] sm:$0xff] %v1407
      %1418 = vst [vmem:[%s262 + $0x10] sm:$0xff] %v1371
      %1419 = vst [vmem:[%s262 + $0x18] sm:$0xff] %v1409
      %1420 = vst [vmem:[%s262 + $0x20] sm:$0xff] %v1374
      %1421 = vst [vmem:[%s262 + $0x28] sm:$0xff] %v1412
      %1422 = vst [vmem:[%s262 + $0x30] sm:$0xff] %v1376
      %1423 = vst [vmem:[%s262 + $0x38] sm:$0xff] %v1414
      %s1424 = smul.u32 2, %s21
      %p1425 = scmp.lt.s32.totalorder %s20, 1
      %s1426 = scalar_select %p1425, %s20, 1
      %p1427 = scmp.lt.s32.totalorder %s1424, 1
      %s1428 = scalar_select %p1427, %s1424, 1
      %s1429 = smul.addr %s1426, 8
      %s1430 = sadd.s32 %s1428, %s1429
      %s1431 = smul.addr %s1430, 8
      %s1432 = scalar_lea.vmem %s5, %s1431
      // Predicated region
      $region41: #{proxynet_forward.1} parent=39 // pred_check
        %p1433 = pneg %p160
      $region42: #{proxynet_forward.1} parent=39 // pred_check_branch
        %1435 = sbr.rel (%p1433) target = $region44
      $region43: #{proxynet_forward.1} parent=39 // pred_region
        %s1436 = smul.u32 2, %s21
      $region44: #{proxynet_forward.1} parent=39 // pred_fallthru
        _
    $region40: #{proxynet_forward.1} parent=5 // pred_fallthru
      _
    %p1437 = scmp.le.s32.totalorder 2, %s11
    // Predicated region
    $region45: #{proxynet_forward.1} parent=5 // pred_check
      %p1438 = pneg %p1437
    $region46: #{proxynet_forward.1} parent=5 // pred_check_branch
      %1440 = sbr.rel (%p1438) target = $region48
    $region47: #{proxynet_forward.1} parent=5 // pred_region
      %s1441 = ssub.s32 %s11, 2
      // Predicated region
      $region49: #{proxynet_forward.1} parent=47 // pred_check
        %p1442 = pneg %p166
      $region50: #{proxynet_forward.1} parent=47 // pred_check_branch
        %1444 = sbr.rel (%p1442) target = $region52
      $region51: #{proxynet_forward.1} parent=47 // pred_region
        %s1445 = smul.u32 2, %s23
        %p1446 = scmp.lt.s32.totalorder %s22, 1
        %s1447 = scalar_select %p1446, %s22, 1
        %p1448 = scmp.lt.s32.totalorder %s1445, 1
        %s1449 = scalar_select %p1448, %s1445, 1
        %s1450 = smul.addr %s1447, 8
        %s1451 = sadd.s32 %s1449, %s1450
        %s1452 = smul.addr %s1451, 8
        %s1453 = scalar_lea.vmem %s5, %s1452
      $region52: #{proxynet_forward.1} parent=47 // pred_fallthru
        _
    $region48: #{proxynet_forward.1} parent=5 // pred_fallthru
      _
  $region6: #{proxynet_forward.1} parent=0 // loop_footer
    %s15 = sadd.s32 1, %s11
  $region7: #{proxynet_forward.1} parent=0 // loop_footer_branch
    %10 = sbr.rel target = $region3
  $region8: #{proxynet_forward.1} parent=0 // loop_exit
    _

</llo_original>
